<compile_context>
chip_gen: v6e
topology: v6e:2x2x1
jax: 0.10.0
libtpu: 0.0.40
codegen_flags: <defaults>
</compile_context>

<pallas_src>
import jax
import jax.numpy as jnp
from jax.experimental import pallas as pl
from jax.experimental.pallas import tpu as pltpu


def _make_kernel(c_in: int, q: int, l_out: int):
    """Kernel body; c_in / q (= Ks*C_in) / l_out are static."""

    def kernel(x_ref, w_ref, b_ref, o_ref):
        # x_ref: (L*C_in, TB)  time-major / channel-minor rows, batch on lanes
        # w_ref: (K, Q)        flattened conv weights (s-major, c-minor)
        # b_ref: (K, 1)        conv bias (f32)
        # o_ref: (K, TB)       max cross-correlation, batch on lanes
        x = x_ref[...]
        w = w_ref[...]
        acc = jnp.full(o_ref.shape, -jnp.inf, dtype=jnp.float32)
        # Static unroll over output times: each step is ONE lane-dense MXU
        # matmul (K, Q) @ (Q, TB) on a contiguous static sublane slice of x,
        # folded into a running elementwise max (VPU — overlaps the MXU).
        # TODO(synk): for large L, replace with a time-tile grid axis + halo.
        for t in range(l_out):
            xt = x[t * c_in:t * c_in + q, :]               # (Q, TB)
            acc = jnp.maximum(
                acc, jnp.dot(w, xt, preferred_element_type=jnp.float32))
        # Bias is time-invariant, so add it after the max.
        o_ref[...] = (acc + b_ref[...]).astype(o_ref.dtype)

    return kernel


def max_cross_correlation(x, weight, bias, shapelets_size, *,
                          batch_tile: int = 128, compute_dtype=None):
    """x: (N, C_in, L) -> (N, 1, num_shapelets), matching the PyTorch forward.

    compute_dtype: set to jnp.bfloat16 on v6e/v7x (and optionally v5e) to halve
    the HBM read of x; accumulation stays in f32.
    """
    n, c_in, length = x.shape
    num_shapelets, w_cin, w_ks = weight.shape
    if w_cin != c_in or w_ks != shapelets_size:
        raise ValueError("weight shape inconsistent with x / shapelets_size")
    if shapelets_size > length:
        raise ValueError("shapelets_size must be <= sequence length")
    l_out = length - shapelets_size + 1
    q = shapelets_size * c_in
    out_dtype = x.dtype

    # Layout plumbing in the wrapper (not compute):
    #   x:  (N, C_in, L) -> (L, C_in, N) -> (L*C_in, N), row index = t*C_in + c
    #   W:  (K, C_in, Ks) -> (K, Ks*C_in), flat index = s*C_in + c
    # so that  (W @ x_t[t*C_in : t*C_in+Q, :])[k, b]  ==  conv output (b, k, t).
    x_t = jnp.transpose(x, (2, 1, 0)).reshape(length * c_in, n)
    w_flat = jnp.transpose(weight, (0, 2, 1)).reshape(num_shapelets, q)
    bias2d = bias.astype(jnp.float32).reshape(num_shapelets, 1)

    if compute_dtype is not None:        # e.g. jnp.bfloat16 on v6e/v7x
        x_t = x_t.astype(compute_dtype)
        w_flat = w_flat.astype(compute_dtype)

    # Batch tiling on the lane axis.  Single block (tb == full batch) for small
    # N; multiple-of-128 lane tiles otherwise (keeps the (8,128) block rule and
    # fully dense lanes).  On v7x pick batch_tile <= N/2 so the "parallel" grid
    # axis has >= 2 blocks and both TensorCores get work.
    tb_req = max(1, batch_tile)
    if n <= tb_req:
        tb = n
        n_pad = n
    else:
        tb = ((tb_req + 127) // 128) * 128
        n_pad = ((n + tb - 1) // tb) * tb
    if n_pad != n:
        # Zero-pad the batch: padded lanes compute max(conv(0)) + bias, which
        # is finite (no NaN) and sliced off below.
        x_t = jnp.pad(x_t, ((0, 0), (0, n_pad - n)))
    n_blocks = pl.cdiv(n_pad, tb)

    cost = pl.CostEstimate(
        flops=2 * n_pad * num_shapelets * q * l_out,
        transcendentals=0,
        bytes_accessed=int(
            x_t.size * x_t.dtype.itemsize
            + w_flat.size * w_flat.dtype.itemsize
            + bias2d.size * 4
            + num_shapelets * n_pad * jnp.dtype(out_dtype).itemsize),
    )

    out_kn = pl.pallas_call(
        _make_kernel(c_in, q, l_out),
        out_shape=jax.ShapeDtypeStruct((num_shapelets, n_pad), out_dtype),
        grid_spec=pltpu.PrefetchScalarGridSpec(
            num_scalar_prefetch=0,
            grid=(n_blocks,),
            in_specs=[
                pl.BlockSpec((length * c_in, tb), lambda i: (0, i)),
                pl.BlockSpec((num_shapelets, q), lambda i: (0, 0)),
                pl.BlockSpec((num_shapelets, 1), lambda i: (0, 0)),
            ],
            out_specs=pl.BlockSpec((num_shapelets, tb), lambda i: (0, i)),
        ),
        compiler_params=pltpu.CompilerParams(
            dimension_semantics=("parallel",),
        ),
        cost_estimate=cost,
    )(x_t, w_flat, bias2d)

    out = jnp.transpose(out_kn[:, :n])            # (N, K)
    return out[:, None, :]                        # (N, 1, K) == transpose(2, 1)


def _reference(x, weight, bias, shapelets_size):
    """Pure-JAX reference (explicit unfold), mirroring the PyTorch forward."""
    _, _, length = x.shape
    l_out = length - shapelets_size + 1
    idx = jnp.arange(l_out)[:, None] + jnp.arange(shapelets_size)[None, :]
    patches = x[:, :, idx]                                  # (N, C_in, L_out, Ks)
    y = jnp.einsum("ncls,kcs->nkl", patches, weight)
    y = y + bias[None, :, None]
    y = jnp.max(y, axis=2, keepdims=True)                   # (N, K, 1)
    return jnp.transpose(y, (0, 2, 1))                      # (N, 1, K)


if __name__ == "__main__":
    # Small, deterministic setup consistent with the module's __init__:
    #   Conv1d(in_channels, num_shapelets, kernel_size=shapelets_size)
    batch = 16
    in_channels = 4
    length = 16
    shapelets_size = 5
    num_shapelets = 8

    key = jax.random.PRNGKey(0)
    kx, kw, kb = jax.random.split(key, 3)
    x = jax.random.normal(kx, (batch, in_channels, length), dtype=jnp.float32)
    # Deterministic synthetic Conv1d parameters (not a checkpoint).
    fan_in = in_channels * shapelets_size
    bound = 1.0 / (fan_in ** 0.5)
    weight = jax.random.uniform(
        kw, (num_shapelets, in_channels, shapelets_size),
        minval=-bound, maxval=bound, dtype=jnp.float32)
    bias = jax.random.uniform(
        kb, (num_shapelets,), minval=-bound, maxval=bound, dtype=jnp.float32)

    # TODO(synk): `masking=True` path (generate_binomial_mask) not implemented;
    # the module's default forward uses masking=False.

    ref = _reference(x, weight, bias, shapelets_size)

    # f32 path (default).
    out = max_cross_correlation(x, weight, bias, shapelets_size)
    out = jax.block_until_ready(out)
    assert out.shape == (batch, 1, num_shapelets), out.shape
    err = float(jnp.max(jnp.abs(out - ref)))
    assert jnp.allclose(out, ref, atol=1e-4, rtol=1e-5), err

    # bf16-input path (recommended on v6e/v7x); f32 accumulation, loose check.
    out_bf16 = max_cross_correlation(
        x, weight, bias, shapelets_size, compute_dtype=jnp.bfloat16)
    out_bf16 = jax.block_until_ready(out_bf16)
    err_bf16 = float(jnp.max(jnp.abs(out_bf16 - ref)))
    assert err_bf16 < 0.15, err_bf16

    print("KERNEL_OK")
</pallas_src>

<mosaic_0001>
module attributes {stable_mosaic.version = 11 : i64} {
  func.func @kernel(%arg0: i32, %arg1: memref<64x16xf32, #tpu.memory_space<vmem>>, %arg2: memref<8x20xf32, #tpu.memory_space<vmem>>, %arg3: memref<8x1xf32, #tpu.memory_space<vmem>>, %arg4: memref<8x16xf32, #tpu.memory_space<vmem>>) attributes {dimension_semantics = [#tpu.dimension_semantics<parallel>], iteration_bounds = array<i64: 1>, scalar_prefetch = 0 : i64, scratch_operands = 0 : i64, tpu.core_type = #tpu.core_type<tc>, window_params = [{transform_indices = @transform_0, window_bounds = array<i64: 64, 16>}, {pipeline_mode = #tpu.pipeline_mode<synchronous>, transform_indices = @transform_1, window_bounds = array<i64: 8, 20>}, {pipeline_mode = #tpu.pipeline_mode<synchronous>, transform_indices = @transform_2, window_bounds = array<i64: 8, 1>}, {transform_indices = @transform_3, window_bounds = array<i64: 8, 16>}]} {
    %c0 = arith.constant 0 : index
    %c0_0 = arith.constant 0 : index
    %0 = vector.load %arg1[%c0, %c0_0] : memref<64x16xf32, #tpu.memory_space<vmem>>, vector<64x16xf32>
    %c0_1 = arith.constant 0 : index
    %c0_2 = arith.constant 0 : index
    %1 = vector.load %arg2[%c0_1, %c0_2] : memref<8x20xf32, #tpu.memory_space<vmem>>, vector<8x20xf32>
    %cst = arith.constant 0xFF800000 : f32
    %2 = vector.broadcast %cst : f32 to vector<8x16xf32>
    %3 = vector.extract_strided_slice %0 {offsets = [0, 0], sizes = [20, 16], strides = [1, 1]} : vector<64x16xf32> to vector<20x16xf32>
    %cst_3 = arith.constant dense<0.000000e+00> : vector<8x16xf32>
    %4 = tpu.matmul %1, %3, %cst_3 {dimension_numbers = #tpu.dot_dimension_numbers<[1], [0], [0], [1], [0, 0, 1, 1], [], []>} : vector<8x20xf32>, vector<20x16xf32>, vector<8x16xf32> -> vector<8x16xf32>
    %5 = arith.maximumf %2, %4 : vector<8x16xf32>
    %6 = vector.extract_strided_slice %0 {offsets = [4, 0], sizes = [20, 16], strides = [1, 1]} : vector<64x16xf32> to vector<20x16xf32>
    %cst_4 = arith.constant dense<0.000000e+00> : vector<8x16xf32>
    %7 = tpu.matmul %1, %6, %cst_4 {dimension_numbers = #tpu.dot_dimension_numbers<[1], [0], [0], [1], [0, 0, 1, 1], [], []>} : vector<8x20xf32>, vector<20x16xf32>, vector<8x16xf32> -> vector<8x16xf32>
    %8 = arith.maximumf %5, %7 : vector<8x16xf32>
    %9 = vector.extract_strided_slice %0 {offsets = [8, 0], sizes = [20, 16], strides = [1, 1]} : vector<64x16xf32> to vector<20x16xf32>
    %cst_5 = arith.constant dense<0.000000e+00> : vector<8x16xf32>
    %10 = tpu.matmul %1, %9, %cst_5 {dimension_numbers = #tpu.dot_dimension_numbers<[1], [0], [0], [1], [0, 0, 1, 1], [], []>} : vector<8x20xf32>, vector<20x16xf32>, vector<8x16xf32> -> vector<8x16xf32>
    %11 = arith.maximumf %8, %10 : vector<8x16xf32>
    %12 = vector.extract_strided_slice %0 {offsets = [12, 0], sizes = [20, 16], strides = [1, 1]} : vector<64x16xf32> to vector<20x16xf32>
    %cst_6 = arith.constant dense<0.000000e+00> : vector<8x16xf32>
    %13 = tpu.matmul %1, %12, %cst_6 {dimension_numbers = #tpu.dot_dimension_numbers<[1], [0], [0], [1], [0, 0, 1, 1], [], []>} : vector<8x20xf32>, vector<20x16xf32>, vector<8x16xf32> -> vector<8x16xf32>
    %14 = arith.maximumf %11, %13 : vector<8x16xf32>
    %15 = vector.extract_strided_slice %0 {offsets = [16, 0], sizes = [20, 16], strides = [1, 1]} : vector<64x16xf32> to vector<20x16xf32>
    %cst_7 = arith.constant dense<0.000000e+00> : vector<8x16xf32>
    %16 = tpu.matmul %1, %15, %cst_7 {dimension_numbers = #tpu.dot_dimension_numbers<[1], [0], [0], [1], [0, 0, 1, 1], [], []>} : vector<8x20xf32>, vector<20x16xf32>, vector<8x16xf32> -> vector<8x16xf32>
    %17 = arith.maximumf %14, %16 : vector<8x16xf32>
    %18 = vector.extract_strided_slice %0 {offsets = [20, 0], sizes = [20, 16], strides = [1, 1]} : vector<64x16xf32> to vector<20x16xf32>
    %cst_8 = arith.constant dense<0.000000e+00> : vector<8x16xf32>
    %19 = tpu.matmul %1, %18, %cst_8 {dimension_numbers = #tpu.dot_dimension_numbers<[1], [0], [0], [1], [0, 0, 1, 1], [], []>} : vector<8x20xf32>, vector<20x16xf32>, vector<8x16xf32> -> vector<8x16xf32>
    %20 = arith.maximumf %17, %19 : vector<8x16xf32>
    %21 = vector.extract_strided_slice %0 {offsets = [24, 0], sizes = [20, 16], strides = [1, 1]} : vector<64x16xf32> to vector<20x16xf32>
    %cst_9 = arith.constant dense<0.000000e+00> : vector<8x16xf32>
    %22 = tpu.matmul %1, %21, %cst_9 {dimension_numbers = #tpu.dot_dimension_numbers<[1], [0], [0], [1], [0, 0, 1, 1], [], []>} : vector<8x20xf32>, vector<20x16xf32>, vector<8x16xf32> -> vector<8x16xf32>
    %23 = arith.maximumf %20, %22 : vector<8x16xf32>
    %24 = vector.extract_strided_slice %0 {offsets = [28, 0], sizes = [20, 16], strides = [1, 1]} : vector<64x16xf32> to vector<20x16xf32>
    %cst_10 = arith.constant dense<0.000000e+00> : vector<8x16xf32>
    %25 = tpu.matmul %1, %24, %cst_10 {dimension_numbers = #tpu.dot_dimension_numbers<[1], [0], [0], [1], [0, 0, 1, 1], [], []>} : vector<8x20xf32>, vector<20x16xf32>, vector<8x16xf32> -> vector<8x16xf32>
    %26 = arith.maximumf %23, %25 : vector<8x16xf32>
    %27 = vector.extract_strided_slice %0 {offsets = [32, 0], sizes = [20, 16], strides = [1, 1]} : vector<64x16xf32> to vector<20x16xf32>
    %cst_11 = arith.constant dense<0.000000e+00> : vector<8x16xf32>
    %28 = tpu.matmul %1, %27, %cst_11 {dimension_numbers = #tpu.dot_dimension_numbers<[1], [0], [0], [1], [0, 0, 1, 1], [], []>} : vector<8x20xf32>, vector<20x16xf32>, vector<8x16xf32> -> vector<8x16xf32>
    %29 = arith.maximumf %26, %28 : vector<8x16xf32>
    %30 = vector.extract_strided_slice %0 {offsets = [36, 0], sizes = [20, 16], strides = [1, 1]} : vector<64x16xf32> to vector<20x16xf32>
    %cst_12 = arith.constant dense<0.000000e+00> : vector<8x16xf32>
    %31 = tpu.matmul %1, %30, %cst_12 {dimension_numbers = #tpu.dot_dimension_numbers<[1], [0], [0], [1], [0, 0, 1, 1], [], []>} : vector<8x20xf32>, vector<20x16xf32>, vector<8x16xf32> -> vector<8x16xf32>
    %32 = arith.maximumf %29, %31 : vector<8x16xf32>
    %33 = vector.extract_strided_slice %0 {offsets = [40, 0], sizes = [20, 16], strides = [1, 1]} : vector<64x16xf32> to vector<20x16xf32>
    %cst_13 = arith.constant dense<0.000000e+00> : vector<8x16xf32>
    %34 = tpu.matmul %1, %33, %cst_13 {dimension_numbers = #tpu.dot_dimension_numbers<[1], [0], [0], [1], [0, 0, 1, 1], [], []>} : vector<8x20xf32>, vector<20x16xf32>, vector<8x16xf32> -> vector<8x16xf32>
    %35 = arith.maximumf %32, %34 : vector<8x16xf32>
    %36 = vector.extract_strided_slice %0 {offsets = [44, 0], sizes = [20, 16], strides = [1, 1]} : vector<64x16xf32> to vector<20x16xf32>
    %cst_14 = arith.constant dense<0.000000e+00> : vector<8x16xf32>
    %37 = tpu.matmul %1, %36, %cst_14 {dimension_numbers = #tpu.dot_dimension_numbers<[1], [0], [0], [1], [0, 0, 1, 1], [], []>} : vector<8x20xf32>, vector<20x16xf32>, vector<8x16xf32> -> vector<8x16xf32>
    %38 = arith.maximumf %35, %37 : vector<8x16xf32>
    %c0_15 = arith.constant 0 : index
    %c0_16 = arith.constant 0 : index
    %39 = vector.load %arg3[%c0_15, %c0_16] : memref<8x1xf32, #tpu.memory_space<vmem>>, vector<8x1xf32>
    %40 = vector.broadcast %39 : vector<8x1xf32> to vector<8x16xf32>
    %41 = arith.addf %38, %40 : vector<8x16xf32>
    %c0_17 = arith.constant 0 : index
    %c0_18 = arith.constant 0 : index
    %42 = vector.load %arg4[%c0_17, %c0_18] : memref<8x16xf32, #tpu.memory_space<vmem>>, vector<8x16xf32>
    tpu.vector_store %arg4[%c0_17, %c0_18], %41 {strides = array<i32>} : memref<8x16xf32, #tpu.memory_space<vmem>>, vector<8x16xf32>,
    return
  }
  func.func @transform_0(%arg0: i32) -> (i32, i32) {
    %c0_i32 = arith.constant 0 : i32
    %c0_i32_0 = arith.constant 0 : i32
    return %c0_i32, %arg0 : i32, i32
  }
  func.func @transform_1(%arg0: i32) -> (i32, i32) {
    %c0_i32 = arith.constant 0 : i32
    %c0_i32_0 = arith.constant 0 : i32
    %c0_i32_1 = arith.constant 0 : i32
    return %c0_i32, %c0_i32_0 : i32, i32
  }
  func.func @transform_2(%arg0: i32) -> (i32, i32) {
    %c0_i32 = arith.constant 0 : i32
    %c0_i32_0 = arith.constant 0 : i32
    %c0_i32_1 = arith.constant 0 : i32
    return %c0_i32, %c0_i32_0 : i32, i32
  }
  func.func @transform_3(%arg0: i32) -> (i32, i32) {
    %c0_i32 = arith.constant 0 : i32
    %c0_i32_0 = arith.constant 0 : i32
    return %c0_i32, %arg0 : i32, i32
  }
}

</mosaic_0001>

<llo_original>
// kernel: tpu_custom_call.1
$region0: #{tpu_custom_call.1}
  #allocation0 [shape = 'u32[]', space=smem, size = 0x4, offset = 0x4, fixed_abs, tag = 'smem constant byte address 0x4 - core index']
  #allocation1 [shape = 'u32[144,128]{1,0:T(1,128)}', space=vmem, size = 0x12000, scoped, tag = 'internal scratch']
  %s0 = inlined_call_operand.vmem [shape: f32[64,16], index: 0, kind: input, shape index: {}]
  %s1 = inlined_call_operand.vmem [shape: f32[8,20], index: 1, kind: input, shape index: {}]
  %s2 = inlined_call_operand.vmem [shape: f32[8,1], index: 2, kind: input, shape index: {}]
  %s3 = inlined_call_operand.hbm [shape: f32[8,16], index: 3, kind: output, shape index: {}]
  %s4 = sld [smem:[#allocation0]]
  $region22: #{tpu_custom_call.1} parent=0
    _
  %s6 = ssub.s32 1, %s4
  %s7 = scalar_select 0, %s6, %s4
  $region1: #{tpu_custom_call.1} parent=0
    #allocation2 [shape = 'u8[4096]{0}', space=vmem, size = 0x1000, scoped, tag = 'output window, operand 0, single buffered']
    #allocation3 [shape = 's32[1]{0}', space=sflag, size = 0x4, scoped, tag = 'scoped memory for tpu_custom_call.1']
    %8 = vsyncpa [#allocation3], 0
    // Predicated region
    $region2: #{tpu_custom_call.1} parent=1 // pred_check
      _
    $region3: #{tpu_custom_call.1} parent=1 // pred_check_branch
      %10 = sbr.rel (0) target = $region5
    $region4: #{tpu_custom_call.1} parent=1 // pred_region
      _
    $region5: #{tpu_custom_call.1} parent=1 // pred_fallthru
      _
    // Predicated region
    $region6: #{tpu_custom_call.1} parent=1 // pred_check
      _
    $region7: #{tpu_custom_call.1} parent=1 // pred_check_branch
      %12 = sbr.rel (0) target = $region9
    $region8: #{tpu_custom_call.1} parent=1 // pred_region
      _
    $region9: #{tpu_custom_call.1} parent=1 // pred_fallthru
      _
    // Predicated region
    $region10: #{tpu_custom_call.1} parent=1 // pred_check
      _
    $region11: #{tpu_custom_call.1} parent=1 // pred_check_branch
      %14 = sbr.rel (0) target = $region13
    $region12: #{tpu_custom_call.1} parent=1 // pred_region
      _
    $region13: #{tpu_custom_call.1} parent=1 // pred_fallthru
      _
    %v15 = vld [vmem:[%s0] sm:$0xff]
    %v16 = vld [vmem:[%s0 + $0x8] sm:$0xff]
    %v17 = vld [vmem:[%s0 + $0x10] sm:$0xff]
    %v18 = vld [vmem:[%s0 + $0x18] sm:$0xff]
    %v19 = vld [vmem:[%s0 + $0x20] sm:$0xff]
    %v20 = vld [vmem:[%s0 + $0x28] sm:$0xff]
    %v21 = vld [vmem:[%s0 + $0x30] sm:$0xff]
    %v22 = vld [vmem:[%s0 + $0x38] sm:$0xff]
    %v23 = vld [vmem:[%s1] sm:$0xff]
    %vm24 = vcmask 162816
    %v26 = vsel %vm24, %v23, 0
    %vm28 = vcmask 1043456
    %v30 = vsel %vm28, %v17, 0
    %32 = vmatprep.subr.mxu0 0.0
    %33 = vmatpush1.msra.mxu0 0.0
    %34 = vmatprep.subr.mxu0 0.0
    %35 = vmatpush1.msra.mxu0 0.0
    %36 = vmatprep.subr.mxu0 0.0
    %37 = vmatpush1.msra.mxu0 0.0
    %38 = vmatprep.subr.mxu0 0.0
    %39 = vmatpush1.msra.mxu0 0.0
    %40 = vmatprep.subr.mxu0 0.0
    %41 = vmatpush1.msra.mxu0 0.0
    %42 = vmatprep.subr.mxu0 0.0
    %43 = vmatpush1.msra.mxu0 0.0
    %44 = vmatprep.subr.mxu0 0.0
    %45 = vmatpush1.msra.mxu0 0.0
    %46 = vmatprep.subr.mxu0 0.0
    %47 = vmatpush1.msra.mxu0 0.0
    %48 = vmatprep.subr.mxu0 0.0
    %49 = vmatpush1.msra.mxu0 0.0
    %50 = vmatprep.subr.mxu0 0.0
    %51 = vmatpush1.msra.mxu0 0.0
    %52 = vmatprep.subr.mxu0 0.0
    %53 = vmatpush1.msra.mxu0 0.0
    %54 = vmatprep.subr.mxu0 0.0
    %55 = vmatpush1.msra.mxu0 0.0
    %56 = vmatprep.subr.mxu0 0.0
    %57 = vmatpush1.msra.mxu0 0.0
    %58 = vmatprep.subr.mxu0 0.0
    %59 = vmatpush1.msra.mxu0 %v30
    %60 = vmatprep.subr.mxu0 0.0
    %61 = vmatpush1.msra.mxu0 %v16
    %62 = vmatprep.subr.mxu0 0.0
    %63 = vmatpush1.msra.mxu0 %v15
    %64 = vmatprep.subr.mxu0 0.0
    %65 = vmatpush2.msra.mxu0 0.0
    %66 = vmatprep.subr.mxu0 0.0
    %67 = vmatpush2.msra.mxu0 0.0
    %68 = vmatprep.subr.mxu0 0.0
    %69 = vmatpush2.msra.mxu0 0.0
    %70 = vmatprep.subr.mxu0 0.0
    %71 = vmatpush2.msra.mxu0 0.0
    %72 = vmatprep.subr.mxu0 0.0
    %73 = vmatpush2.msra.mxu0 0.0
    %74 = vmatprep.subr.mxu0 0.0
    %75 = vmatpush2.msra.mxu0 0.0
    %76 = vmatprep.subr.mxu0 0.0
    %77 = vmatpush2.msra.mxu0 0.0
    %78 = vmatprep.subr.mxu0 0.0
    %79 = vmatpush2.msra.mxu0 0.0
    %80 = vmatprep.subr.mxu0 0.0
    %81 = vmatpush2.msra.mxu0 0.0
    %82 = vmatprep.subr.mxu0 0.0
    %83 = vmatpush2.msra.mxu0 0.0
    %84 = vmatprep.subr.mxu0 0.0
    %85 = vmatpush2.msra.mxu0 0.0
    %86 = vmatprep.subr.mxu0 0.0
    %87 = vmatpush2.msra.mxu0 0.0
    %88 = vmatprep.subr.mxu0 0.0
    %89 = vmatpush2.msra.mxu0 0.0
    %90 = vmatprep.subr.mxu0 0.0
    %91 = vmatpush2.msra.mxu0 0.0
    %92 = vmatprep.subr.mxu0 0.0
    %93 = vmatpush2.msra.mxu0 0.0
    %94 = vmatprep.subr.mxu0 0.0
    %95 = vmatpush2.msra.mxu0 0.0
    %96 = vmatprep.mubr.f32.mxu0 0.0
    %97 = vmatmul.mubr.f32.gmra.mxu0 %v26
    %v98 = vpop.f32.mrf.mxu0
    %v99 = vadd.f32 0.0, %v98
    %v100 = vpop.f32.mrf.mxu0
    %101 = vdwg.mxu0
    %v104 = vrot.slane %v15, 4
    %v105 = vrot.slane %v16, 4
    %v106 = vsel %vm28, %v104, %v105
    %v107 = vrot.slane %v17, 4
    %v108 = vsel %vm28, %v105, %v107
    %v111 = vsel %vm28, %v107, 0
    %113 = vmatprep.subr.mxu0 0.0
    %114 = vmatpush1.msra.mxu0 0.0
    %115 = vmatprep.subr.mxu0 0.0
    %116 = vmatpush1.msra.mxu0 0.0
    %117 = vmatprep.subr.mxu0 0.0
    %118 = vmatpush1.msra.mxu0 0.0
    %119 = vmatprep.subr.mxu0 0.0
    %120 = vmatpush1.msra.mxu0 0.0
    %121 = vmatprep.subr.mxu0 0.0
    %122 = vmatpush1.msra.mxu0 0.0
    %123 = vmatprep.subr.mxu0 0.0
    %124 = vmatpush1.msra.mxu0 0.0
    %125 = vmatprep.subr.mxu0 0.0
    %126 = vmatpush1.msra.mxu0 0.0
    %127 = vmatprep.subr.mxu0 0.0
    %128 = vmatpush1.msra.mxu0 0.0
    %129 = vmatprep.subr.mxu0 0.0
    %130 = vmatpush1.msra.mxu0 0.0
    %131 = vmatprep.subr.mxu0 0.0
    %132 = vmatpush1.msra.mxu0 0.0
    %133 = vmatprep.subr.mxu0 0.0
    %134 = vmatpush1.msra.mxu0 0.0
    %135 = vmatprep.subr.mxu0 0.0
    %136 = vmatpush1.msra.mxu0 0.0
    %137 = vmatprep.subr.mxu0 0.0
    %138 = vmatpush1.msra.mxu0 0.0
    %139 = vmatprep.subr.mxu0 0.0
    %140 = vmatpush1.msra.mxu0 %v111
    %141 = vmatprep.subr.mxu0 0.0
    %142 = vmatpush1.msra.mxu0 %v108
    %143 = vmatprep.subr.mxu0 0.0
    %144 = vmatpush1.msra.mxu0 %v106
    %145 = vmatprep.subr.mxu0 0.0
    %146 = vmatpush2.msra.mxu0 0.0
    %147 = vmatprep.subr.mxu0 0.0
    %148 = vmatpush2.msra.mxu0 0.0
    %149 = vmatprep.subr.mxu0 0.0
    %150 = vmatpush2.msra.mxu0 0.0
    %151 = vmatprep.subr.mxu0 0.0
    %152 = vmatpush2.msra.mxu0 0.0
    %153 = vmatprep.subr.mxu0 0.0
    %154 = vmatpush2.msra.mxu0 0.0
    %155 = vmatprep.subr.mxu0 0.0
    %156 = vmatpush2.msra.mxu0 0.0
    %157 = vmatprep.subr.mxu0 0.0
    %158 = vmatpush2.msra.mxu0 0.0
    %159 = vmatprep.subr.mxu0 0.0
    %160 = vmatpush2.msra.mxu0 0.0
    %161 = vmatprep.subr.mxu0 0.0
    %162 = vmatpush2.msra.mxu0 0.0
    %163 = vmatprep.subr.mxu0 0.0
    %164 = vmatpush2.msra.mxu0 0.0
    %165 = vmatprep.subr.mxu0 0.0
    %166 = vmatpush2.msra.mxu0 0.0
    %167 = vmatprep.subr.mxu0 0.0
    %168 = vmatpush2.msra.mxu0 0.0
    %169 = vmatprep.subr.mxu0 0.0
    %170 = vmatpush2.msra.mxu0 0.0
    %171 = vmatprep.subr.mxu0 0.0
    %172 = vmatpush2.msra.mxu0 0.0
    %173 = vmatprep.subr.mxu0 0.0
    %174 = vmatpush2.msra.mxu0 0.0
    %175 = vmatprep.subr.mxu0 0.0
    %176 = vmatpush2.msra.mxu0 0.0
    %177 = vmatprep.mubr.f32.mxu0 0.0
    %178 = vmatmul.mubr.f32.gmra.mxu0 %v26
    %v179 = vpop.f32.mrf.mxu0
    %v180 = vadd.f32 0.0, %v179
    %v181 = vpop.f32.mrf.mxu0
    %182 = vdwg.mxu0
    %v183 = vmax.f32 %v99, %v180
    %v185 = vsel %vm28, %v18, 0
    %187 = vmatprep.subr.mxu0 0.0
    %188 = vmatpush1.msra.mxu0 0.0
    %189 = vmatprep.subr.mxu0 0.0
    %190 = vmatpush1.msra.mxu0 0.0
    %191 = vmatprep.subr.mxu0 0.0
    %192 = vmatpush1.msra.mxu0 0.0
    %193 = vmatprep.subr.mxu0 0.0
    %194 = vmatpush1.msra.mxu0 0.0
    %195 = vmatprep.subr.mxu0 0.0
    %196 = vmatpush1.msra.mxu0 0.0
    %197 = vmatprep.subr.mxu0 0.0
    %198 = vmatpush1.msra.mxu0 0.0
    %199 = vmatprep.subr.mxu0 0.0
    %200 = vmatpush1.msra.mxu0 0.0
    %201 = vmatprep.subr.mxu0 0.0
    %202 = vmatpush1.msra.mxu0 0.0
    %203 = vmatprep.subr.mxu0 0.0
    %204 = vmatpush1.msra.mxu0 0.0
    %205 = vmatprep.subr.mxu0 0.0
    %206 = vmatpush1.msra.mxu0 0.0
    %207 = vmatprep.subr.mxu0 0.0
    %208 = vmatpush1.msra.mxu0 0.0
    %209 = vmatprep.subr.mxu0 0.0
    %210 = vmatpush1.msra.mxu0 0.0
    %211 = vmatprep.subr.mxu0 0.0
    %212 = vmatpush1.msra.mxu0 0.0
    %213 = vmatprep.subr.mxu0 0.0
    %214 = vmatpush1.msra.mxu0 %v185
    %215 = vmatprep.subr.mxu0 0.0
    %216 = vmatpush1.msra.mxu0 %v17
    %217 = vmatprep.subr.mxu0 0.0
    %218 = vmatpush1.msra.mxu0 %v16
    %219 = vmatprep.subr.mxu0 0.0
    %220 = vmatpush2.msra.mxu0 0.0
    %221 = vmatprep.subr.mxu0 0.0
    %222 = vmatpush2.msra.mxu0 0.0
    %223 = vmatprep.subr.mxu0 0.0
    %224 = vmatpush2.msra.mxu0 0.0
    %225 = vmatprep.subr.mxu0 0.0
    %226 = vmatpush2.msra.mxu0 0.0
    %227 = vmatprep.subr.mxu0 0.0
    %228 = vmatpush2.msra.mxu0 0.0
    %229 = vmatprep.subr.mxu0 0.0
    %230 = vmatpush2.msra.mxu0 0.0
    %231 = vmatprep.subr.mxu0 0.0
    %232 = vmatpush2.msra.mxu0 0.0
    %233 = vmatprep.subr.mxu0 0.0
    %234 = vmatpush2.msra.mxu0 0.0
    %235 = vmatprep.subr.mxu0 0.0
    %236 = vmatpush2.msra.mxu0 0.0
    %237 = vmatprep.subr.mxu0 0.0
    %238 = vmatpush2.msra.mxu0 0.0
    %239 = vmatprep.subr.mxu0 0.0
    %240 = vmatpush2.msra.mxu0 0.0
    %241 = vmatprep.subr.mxu0 0.0
    %242 = vmatpush2.msra.mxu0 0.0
    %243 = vmatprep.subr.mxu0 0.0
    %244 = vmatpush2.msra.mxu0 0.0
    %245 = vmatprep.subr.mxu0 0.0
    %246 = vmatpush2.msra.mxu0 0.0
    %247 = vmatprep.subr.mxu0 0.0
    %248 = vmatpush2.msra.mxu0 0.0
    %249 = vmatprep.subr.mxu0 0.0
    %250 = vmatpush2.msra.mxu0 0.0
    %251 = vmatprep.mubr.f32.mxu0 0.0
    %252 = vmatmul.mubr.f32.gmra.mxu0 %v26
    %v253 = vpop.f32.mrf.mxu0
    %v254 = vadd.f32 0.0, %v253
    %v255 = vpop.f32.mrf.mxu0
    %256 = vdwg.mxu0
    %v257 = vmax.f32 %v183, %v254
    %v258 = vrot.slane %v18, 4
    %v259 = vsel %vm28, %v107, %v258
    %v261 = vsel %vm28, %v258, 0
    %263 = vmatprep.subr.mxu0 0.0
    %264 = vmatpush1.msra.mxu0 0.0
    %265 = vmatprep.subr.mxu0 0.0
    %266 = vmatpush1.msra.mxu0 0.0
    %267 = vmatprep.subr.mxu0 0.0
    %268 = vmatpush1.msra.mxu0 0.0
    %269 = vmatprep.subr.mxu0 0.0
    %270 = vmatpush1.msra.mxu0 0.0
    %271 = vmatprep.subr.mxu0 0.0
    %272 = vmatpush1.msra.mxu0 0.0
    %273 = vmatprep.subr.mxu0 0.0
    %274 = vmatpush1.msra.mxu0 0.0
    %275 = vmatprep.subr.mxu0 0.0
    %276 = vmatpush1.msra.mxu0 0.0
    %277 = vmatprep.subr.mxu0 0.0
    %278 = vmatpush1.msra.mxu0 0.0
    %279 = vmatprep.subr.mxu0 0.0
    %280 = vmatpush1.msra.mxu0 0.0
    %281 = vmatprep.subr.mxu0 0.0
    %282 = vmatpush1.msra.mxu0 0.0
    %283 = vmatprep.subr.mxu0 0.0
    %284 = vmatpush1.msra.mxu0 0.0
    %285 = vmatprep.subr.mxu0 0.0
    %286 = vmatpush1.msra.mxu0 0.0
    %287 = vmatprep.subr.mxu0 0.0
    %288 = vmatpush1.msra.mxu0 0.0
    %289 = vmatprep.subr.mxu0 0.0
    %290 = vmatpush1.msra.mxu0 %v261
    %291 = vmatprep.subr.mxu0 0.0
    %292 = vmatpush1.msra.mxu0 %v259
    %293 = vmatprep.subr.mxu0 0.0
    %294 = vmatpush1.msra.mxu0 %v108
    %295 = vmatprep.subr.mxu0 0.0
    %296 = vmatpush2.msra.mxu0 0.0
    %297 = vmatprep.subr.mxu0 0.0
    %298 = vmatpush2.msra.mxu0 0.0
    %299 = vmatprep.subr.mxu0 0.0
    %300 = vmatpush2.msra.mxu0 0.0
    %301 = vmatprep.subr.mxu0 0.0
    %302 = vmatpush2.msra.mxu0 0.0
    %303 = vmatprep.subr.mxu0 0.0
    %304 = vmatpush2.msra.mxu0 0.0
    %305 = vmatprep.subr.mxu0 0.0
    %306 = vmatpush2.msra.mxu0 0.0
    %307 = vmatprep.subr.mxu0 0.0
    %308 = vmatpush2.msra.mxu0 0.0
    %309 = vmatprep.subr.mxu0 0.0
    %310 = vmatpush2.msra.mxu0 0.0
    %311 = vmatprep.subr.mxu0 0.0
    %312 = vmatpush2.msra.mxu0 0.0
    %313 = vmatprep.subr.mxu0 0.0
    %314 = vmatpush2.msra.mxu0 0.0
    %315 = vmatprep.subr.mxu0 0.0
    %316 = vmatpush2.msra.mxu0 0.0
    %317 = vmatprep.subr.mxu0 0.0
    %318 = vmatpush2.msra.mxu0 0.0
    %319 = vmatprep.subr.mxu0 0.0
    %320 = vmatpush2.msra.mxu0 0.0
    %321 = vmatprep.subr.mxu0 0.0
    %322 = vmatpush2.msra.mxu0 0.0
    %323 = vmatprep.subr.mxu0 0.0
    %324 = vmatpush2.msra.mxu0 0.0
    %325 = vmatprep.subr.mxu0 0.0
    %326 = vmatpush2.msra.mxu0 0.0
    %327 = vmatprep.mubr.f32.mxu0 0.0
    %328 = vmatmul.mubr.f32.gmra.mxu0 %v26
    %v329 = vpop.f32.mrf.mxu0
    %v330 = vadd.f32 0.0, %v329
    %v331 = vpop.f32.mrf.mxu0
    %332 = vdwg.mxu0
    %v333 = vmax.f32 %v257, %v330
    %v335 = vsel %vm28, %v19, 0
    %337 = vmatprep.subr.mxu0 0.0
    %338 = vmatpush1.msra.mxu0 0.0
    %339 = vmatprep.subr.mxu0 0.0
    %340 = vmatpush1.msra.mxu0 0.0
    %341 = vmatprep.subr.mxu0 0.0
    %342 = vmatpush1.msra.mxu0 0.0
    %343 = vmatprep.subr.mxu0 0.0
    %344 = vmatpush1.msra.mxu0 0.0
    %345 = vmatprep.subr.mxu0 0.0
    %346 = vmatpush1.msra.mxu0 0.0
    %347 = vmatprep.subr.mxu0 0.0
    %348 = vmatpush1.msra.mxu0 0.0
    %349 = vmatprep.subr.mxu0 0.0
    %350 = vmatpush1.msra.mxu0 0.0
    %351 = vmatprep.subr.mxu0 0.0
    %352 = vmatpush1.msra.mxu0 0.0
    %353 = vmatprep.subr.mxu0 0.0
    %354 = vmatpush1.msra.mxu0 0.0
    %355 = vmatprep.subr.mxu0 0.0
    %356 = vmatpush1.msra.mxu0 0.0
    %357 = vmatprep.subr.mxu0 0.0
    %358 = vmatpush1.msra.mxu0 0.0
    %359 = vmatprep.subr.mxu0 0.0
    %360 = vmatpush1.msra.mxu0 0.0
    %361 = vmatprep.subr.mxu0 0.0
    %362 = vmatpush1.msra.mxu0 0.0
    %363 = vmatprep.subr.mxu0 0.0
    %364 = vmatpush1.msra.mxu0 %v335
    %365 = vmatprep.subr.mxu0 0.0
    %366 = vmatpush1.msra.mxu0 %v18
    %367 = vmatprep.subr.mxu0 0.0
    %368 = vmatpush1.msra.mxu0 %v17
    %369 = vmatprep.subr.mxu0 0.0
    %370 = vmatpush2.msra.mxu0 0.0
    %371 = vmatprep.subr.mxu0 0.0
    %372 = vmatpush2.msra.mxu0 0.0
    %373 = vmatprep.subr.mxu0 0.0
    %374 = vmatpush2.msra.mxu0 0.0
    %375 = vmatprep.subr.mxu0 0.0
    %376 = vmatpush2.msra.mxu0 0.0
    %377 = vmatprep.subr.mxu0 0.0
    %378 = vmatpush2.msra.mxu0 0.0
    %379 = vmatprep.subr.mxu0 0.0
    %380 = vmatpush2.msra.mxu0 0.0
    %381 = vmatprep.subr.mxu0 0.0
    %382 = vmatpush2.msra.mxu0 0.0
    %383 = vmatprep.subr.mxu0 0.0
    %384 = vmatpush2.msra.mxu0 0.0
    %385 = vmatprep.subr.mxu0 0.0
    %386 = vmatpush2.msra.mxu0 0.0
    %387 = vmatprep.subr.mxu0 0.0
    %388 = vmatpush2.msra.mxu0 0.0
    %389 = vmatprep.subr.mxu0 0.0
    %390 = vmatpush2.msra.mxu0 0.0
    %391 = vmatprep.subr.mxu0 0.0
    %392 = vmatpush2.msra.mxu0 0.0
    %393 = vmatprep.subr.mxu0 0.0
    %394 = vmatpush2.msra.mxu0 0.0
    %395 = vmatprep.subr.mxu0 0.0
    %396 = vmatpush2.msra.mxu0 0.0
    %397 = vmatprep.subr.mxu0 0.0
    %398 = vmatpush2.msra.mxu0 0.0
    %399 = vmatprep.subr.mxu0 0.0
    %400 = vmatpush2.msra.mxu0 0.0
    %401 = vmatprep.mubr.f32.mxu0 0.0
    %402 = vmatmul.mubr.f32.gmra.mxu0 %v26
    %v403 = vpop.f32.mrf.mxu0
    %v404 = vadd.f32 0.0, %v403
    %v405 = vpop.f32.mrf.mxu0
    %406 = vdwg.mxu0
    %v407 = vmax.f32 %v333, %v404
    %v408 = vrot.slane %v19, 4
    %v409 = vsel %vm28, %v258, %v408
    %v411 = vsel %vm28, %v408, 0
    %413 = vmatprep.subr.mxu0 0.0
    %414 = vmatpush1.msra.mxu0 0.0
    %415 = vmatprep.subr.mxu0 0.0
    %416 = vmatpush1.msra.mxu0 0.0
    %417 = vmatprep.subr.mxu0 0.0
    %418 = vmatpush1.msra.mxu0 0.0
    %419 = vmatprep.subr.mxu0 0.0
    %420 = vmatpush1.msra.mxu0 0.0
    %421 = vmatprep.subr.mxu0 0.0
    %422 = vmatpush1.msra.mxu0 0.0
    %423 = vmatprep.subr.mxu0 0.0
    %424 = vmatpush1.msra.mxu0 0.0
    %425 = vmatprep.subr.mxu0 0.0
    %426 = vmatpush1.msra.mxu0 0.0
    %427 = vmatprep.subr.mxu0 0.0
    %428 = vmatpush1.msra.mxu0 0.0
    %429 = vmatprep.subr.mxu0 0.0
    %430 = vmatpush1.msra.mxu0 0.0
    %431 = vmatprep.subr.mxu0 0.0
    %432 = vmatpush1.msra.mxu0 0.0
    %433 = vmatprep.subr.mxu0 0.0
    %434 = vmatpush1.msra.mxu0 0.0
    %435 = vmatprep.subr.mxu0 0.0
    %436 = vmatpush1.msra.mxu0 0.0
    %437 = vmatprep.subr.mxu0 0.0
    %438 = vmatpush1.msra.mxu0 0.0
    %439 = vmatprep.subr.mxu0 0.0
    %440 = vmatpush1.msra.mxu0 %v411
    %441 = vmatprep.subr.mxu0 0.0
    %442 = vmatpush1.msra.mxu0 %v409
    %443 = vmatprep.subr.mxu0 0.0
    %444 = vmatpush1.msra.mxu0 %v259
    %445 = vmatprep.subr.mxu0 0.0
    %446 = vmatpush2.msra.mxu0 0.0
    %447 = vmatprep.subr.mxu0 0.0
    %448 = vmatpush2.msra.mxu0 0.0
    %449 = vmatprep.subr.mxu0 0.0
    %450 = vmatpush2.msra.mxu0 0.0
    %451 = vmatprep.subr.mxu0 0.0
    %452 = vmatpush2.msra.mxu0 0.0
    %453 = vmatprep.subr.mxu0 0.0
    %454 = vmatpush2.msra.mxu0 0.0
    %455 = vmatprep.subr.mxu0 0.0
    %456 = vmatpush2.msra.mxu0 0.0
    %457 = vmatprep.subr.mxu0 0.0
    %458 = vmatpush2.msra.mxu0 0.0
    %459 = vmatprep.subr.mxu0 0.0
    %460 = vmatpush2.msra.mxu0 0.0
    %461 = vmatprep.subr.mxu0 0.0
    %462 = vmatpush2.msra.mxu0 0.0
    %463 = vmatprep.subr.mxu0 0.0
    %464 = vmatpush2.msra.mxu0 0.0
    %465 = vmatprep.subr.mxu0 0.0
    %466 = vmatpush2.msra.mxu0 0.0
    %467 = vmatprep.subr.mxu0 0.0
    %468 = vmatpush2.msra.mxu0 0.0
    %469 = vmatprep.subr.mxu0 0.0
    %470 = vmatpush2.msra.mxu0 0.0
    %471 = vmatprep.subr.mxu0 0.0
    %472 = vmatpush2.msra.mxu0 0.0
    %473 = vmatprep.subr.mxu0 0.0
    %474 = vmatpush2.msra.mxu0 0.0
    %475 = vmatprep.subr.mxu0 0.0
    %476 = vmatpush2.msra.mxu0 0.0
    %477 = vmatprep.mubr.f32.mxu0 0.0
    %478 = vmatmul.mubr.f32.gmra.mxu0 %v26
    %v479 = vpop.f32.mrf.mxu0
    %v480 = vadd.f32 0.0, %v479
    %v481 = vpop.f32.mrf.mxu0
    %482 = vdwg.mxu0
    %v483 = vmax.f32 %v407, %v480
    %v485 = vsel %vm28, %v20, 0
    %487 = vmatprep.subr.mxu0 0.0
    %488 = vmatpush1.msra.mxu0 0.0
    %489 = vmatprep.subr.mxu0 0.0
    %490 = vmatpush1.msra.mxu0 0.0
    %491 = vmatprep.subr.mxu0 0.0
    %492 = vmatpush1.msra.mxu0 0.0
    %493 = vmatprep.subr.mxu0 0.0
    %494 = vmatpush1.msra.mxu0 0.0
    %495 = vmatprep.subr.mxu0 0.0
    %496 = vmatpush1.msra.mxu0 0.0
    %497 = vmatprep.subr.mxu0 0.0
    %498 = vmatpush1.msra.mxu0 0.0
    %499 = vmatprep.subr.mxu0 0.0
    %500 = vmatpush1.msra.mxu0 0.0
    %501 = vmatprep.subr.mxu0 0.0
    %502 = vmatpush1.msra.mxu0 0.0
    %503 = vmatprep.subr.mxu0 0.0
    %504 = vmatpush1.msra.mxu0 0.0
    %505 = vmatprep.subr.mxu0 0.0
    %506 = vmatpush1.msra.mxu0 0.0
    %507 = vmatprep.subr.mxu0 0.0
    %508 = vmatpush1.msra.mxu0 0.0
    %509 = vmatprep.subr.mxu0 0.0
    %510 = vmatpush1.msra.mxu0 0.0
    %511 = vmatprep.subr.mxu0 0.0
    %512 = vmatpush1.msra.mxu0 0.0
    %513 = vmatprep.subr.mxu0 0.0
    %514 = vmatpush1.msra.mxu0 %v485
    %515 = vmatprep.subr.mxu0 0.0
    %516 = vmatpush1.msra.mxu0 %v19
    %517 = vmatprep.subr.mxu0 0.0
    %518 = vmatpush1.msra.mxu0 %v18
    %519 = vmatprep.subr.mxu0 0.0
    %520 = vmatpush2.msra.mxu0 0.0
    %521 = vmatprep.subr.mxu0 0.0
    %522 = vmatpush2.msra.mxu0 0.0
    %523 = vmatprep.subr.mxu0 0.0
    %524 = vmatpush2.msra.mxu0 0.0
    %525 = vmatprep.subr.mxu0 0.0
    %526 = vmatpush2.msra.mxu0 0.0
    %527 = vmatprep.subr.mxu0 0.0
    %528 = vmatpush2.msra.mxu0 0.0
    %529 = vmatprep.subr.mxu0 0.0
    %530 = vmatpush2.msra.mxu0 0.0
    %531 = vmatprep.subr.mxu0 0.0
    %532 = vmatpush2.msra.mxu0 0.0
    %533 = vmatprep.subr.mxu0 0.0
    %534 = vmatpush2.msra.mxu0 0.0
    %535 = vmatprep.subr.mxu0 0.0
    %536 = vmatpush2.msra.mxu0 0.0
    %537 = vmatprep.subr.mxu0 0.0
    %538 = vmatpush2.msra.mxu0 0.0
    %539 = vmatprep.subr.mxu0 0.0
    %540 = vmatpush2.msra.mxu0 0.0
    %541 = vmatprep.subr.mxu0 0.0
    %542 = vmatpush2.msra.mxu0 0.0
    %543 = vmatprep.subr.mxu0 0.0
    %544 = vmatpush2.msra.mxu0 0.0
    %545 = vmatprep.subr.mxu0 0.0
    %546 = vmatpush2.msra.mxu0 0.0
    %547 = vmatprep.subr.mxu0 0.0
    %548 = vmatpush2.msra.mxu0 0.0
    %549 = vmatprep.subr.mxu0 0.0
    %550 = vmatpush2.msra.mxu0 0.0
    %551 = vmatprep.mubr.f32.mxu0 0.0
    %552 = vmatmul.mubr.f32.gmra.mxu0 %v26
    %v553 = vpop.f32.mrf.mxu0
    %v554 = vadd.f32 0.0, %v553
    %v555 = vpop.f32.mrf.mxu0
    %556 = vdwg.mxu0
    %v557 = vmax.f32 %v483, %v554
    %v558 = vrot.slane %v20, 4
    %v559 = vsel %vm28, %v408, %v558
    %v561 = vsel %vm28, %v558, 0
    %563 = vmatprep.subr.mxu0 0.0
    %564 = vmatpush1.msra.mxu0 0.0
    %565 = vmatprep.subr.mxu0 0.0
    %566 = vmatpush1.msra.mxu0 0.0
    %567 = vmatprep.subr.mxu0 0.0
    %568 = vmatpush1.msra.mxu0 0.0
    %569 = vmatprep.subr.mxu0 0.0
    %570 = vmatpush1.msra.mxu0 0.0
    %571 = vmatprep.subr.mxu0 0.0
    %572 = vmatpush1.msra.mxu0 0.0
    %573 = vmatprep.subr.mxu0 0.0
    %574 = vmatpush1.msra.mxu0 0.0
    %575 = vmatprep.subr.mxu0 0.0
    %576 = vmatpush1.msra.mxu0 0.0
    %577 = vmatprep.subr.mxu0 0.0
    %578 = vmatpush1.msra.mxu0 0.0
    %579 = vmatprep.subr.mxu0 0.0
    %580 = vmatpush1.msra.mxu0 0.0
    %581 = vmatprep.subr.mxu0 0.0
    %582 = vmatpush1.msra.mxu0 0.0
    %583 = vmatprep.subr.mxu0 0.0
    %584 = vmatpush1.msra.mxu0 0.0
    %585 = vmatprep.subr.mxu0 0.0
    %586 = vmatpush1.msra.mxu0 0.0
    %587 = vmatprep.subr.mxu0 0.0
    %588 = vmatpush1.msra.mxu0 0.0
    %589 = vmatprep.subr.mxu0 0.0
    %590 = vmatpush1.msra.mxu0 %v561
    %591 = vmatprep.subr.mxu0 0.0
    %592 = vmatpush1.msra.mxu0 %v559
    %593 = vmatprep.subr.mxu0 0.0
    %594 = vmatpush1.msra.mxu0 %v409
    %595 = vmatprep.subr.mxu0 0.0
    %596 = vmatpush2.msra.mxu0 0.0
    %597 = vmatprep.subr.mxu0 0.0
    %598 = vmatpush2.msra.mxu0 0.0
    %599 = vmatprep.subr.mxu0 0.0
    %600 = vmatpush2.msra.mxu0 0.0
    %601 = vmatprep.subr.mxu0 0.0
    %602 = vmatpush2.msra.mxu0 0.0
    %603 = vmatprep.subr.mxu0 0.0
    %604 = vmatpush2.msra.mxu0 0.0
    %605 = vmatprep.subr.mxu0 0.0
    %606 = vmatpush2.msra.mxu0 0.0
    %607 = vmatprep.subr.mxu0 0.0
    %608 = vmatpush2.msra.mxu0 0.0
    %609 = vmatprep.subr.mxu0 0.0
    %610 = vmatpush2.msra.mxu0 0.0
    %611 = vmatprep.subr.mxu0 0.0
    %612 = vmatpush2.msra.mxu0 0.0
    %613 = vmatprep.subr.mxu0 0.0
    %614 = vmatpush2.msra.mxu0 0.0
    %615 = vmatprep.subr.mxu0 0.0
    %616 = vmatpush2.msra.mxu0 0.0
    %617 = vmatprep.subr.mxu0 0.0
    %618 = vmatpush2.msra.mxu0 0.0
    %619 = vmatprep.subr.mxu0 0.0
    %620 = vmatpush2.msra.mxu0 0.0
    %621 = vmatprep.subr.mxu0 0.0
    %622 = vmatpush2.msra.mxu0 0.0
    %623 = vmatprep.subr.mxu0 0.0
    %624 = vmatpush2.msra.mxu0 0.0
    %625 = vmatprep.subr.mxu0 0.0
    %626 = vmatpush2.msra.mxu0 0.0
    %627 = vmatprep.mubr.f32.mxu0 0.0
    %628 = vmatmul.mubr.f32.gmra.mxu0 %v26
    %v629 = vpop.f32.mrf.mxu0
    %v630 = vadd.f32 0.0, %v629
    %v631 = vpop.f32.mrf.mxu0
    %632 = vdwg.mxu0
    %v633 = vmax.f32 %v557, %v630
    %v635 = vsel %vm28, %v21, 0
    %637 = vmatprep.subr.mxu0 0.0
    %638 = vmatpush1.msra.mxu0 0.0
    %639 = vmatprep.subr.mxu0 0.0
    %640 = vmatpush1.msra.mxu0 0.0
    %641 = vmatprep.subr.mxu0 0.0
    %642 = vmatpush1.msra.mxu0 0.0
    %643 = vmatprep.subr.mxu0 0.0
    %644 = vmatpush1.msra.mxu0 0.0
    %645 = vmatprep.subr.mxu0 0.0
    %646 = vmatpush1.msra.mxu0 0.0
    %647 = vmatprep.subr.mxu0 0.0
    %648 = vmatpush1.msra.mxu0 0.0
    %649 = vmatprep.subr.mxu0 0.0
    %650 = vmatpush1.msra.mxu0 0.0
    %651 = vmatprep.subr.mxu0 0.0
    %652 = vmatpush1.msra.mxu0 0.0
    %653 = vmatprep.subr.mxu0 0.0
    %654 = vmatpush1.msra.mxu0 0.0
    %655 = vmatprep.subr.mxu0 0.0
    %656 = vmatpush1.msra.mxu0 0.0
    %657 = vmatprep.subr.mxu0 0.0
    %658 = vmatpush1.msra.mxu0 0.0
    %659 = vmatprep.subr.mxu0 0.0
    %660 = vmatpush1.msra.mxu0 0.0
    %661 = vmatprep.subr.mxu0 0.0
    %662 = vmatpush1.msra.mxu0 0.0
    %663 = vmatprep.subr.mxu0 0.0
    %664 = vmatpush1.msra.mxu0 %v635
    %665 = vmatprep.subr.mxu0 0.0
    %666 = vmatpush1.msra.mxu0 %v20
    %667 = vmatprep.subr.mxu0 0.0
    %668 = vmatpush1.msra.mxu0 %v19
    %669 = vmatprep.subr.mxu0 0.0
    %670 = vmatpush2.msra.mxu0 0.0
    %671 = vmatprep.subr.mxu0 0.0
    %672 = vmatpush2.msra.mxu0 0.0
    %673 = vmatprep.subr.mxu0 0.0
    %674 = vmatpush2.msra.mxu0 0.0
    %675 = vmatprep.subr.mxu0 0.0
    %676 = vmatpush2.msra.mxu0 0.0
    %677 = vmatprep.subr.mxu0 0.0
    %678 = vmatpush2.msra.mxu0 0.0
    %679 = vmatprep.subr.mxu0 0.0
    %680 = vmatpush2.msra.mxu0 0.0
    %681 = vmatprep.subr.mxu0 0.0
    %682 = vmatpush2.msra.mxu0 0.0
    %683 = vmatprep.subr.mxu0 0.0
    %684 = vmatpush2.msra.mxu0 0.0
    %685 = vmatprep.subr.mxu0 0.0
    %686 = vmatpush2.msra.mxu0 0.0
    %687 = vmatprep.subr.mxu0 0.0
    %688 = vmatpush2.msra.mxu0 0.0
    %689 = vmatprep.subr.mxu0 0.0
    %690 = vmatpush2.msra.mxu0 0.0
    %691 = vmatprep.subr.mxu0 0.0
    %692 = vmatpush2.msra.mxu0 0.0
    %693 = vmatprep.subr.mxu0 0.0
    %694 = vmatpush2.msra.mxu0 0.0
    %695 = vmatprep.subr.mxu0 0.0
    %696 = vmatpush2.msra.mxu0 0.0
    %697 = vmatprep.subr.mxu0 0.0
    %698 = vmatpush2.msra.mxu0 0.0
    %699 = vmatprep.subr.mxu0 0.0
    %700 = vmatpush2.msra.mxu0 0.0
    %701 = vmatprep.mubr.f32.mxu0 0.0
    %702 = vmatmul.mubr.f32.gmra.mxu0 %v26
    %v703 = vpop.f32.mrf.mxu0
    %v704 = vadd.f32 0.0, %v703
    %v705 = vpop.f32.mrf.mxu0
    %706 = vdwg.mxu0
    %v707 = vmax.f32 %v633, %v704
    %v708 = vrot.slane %v21, 4
    %v709 = vsel %vm28, %v558, %v708
    %v711 = vsel %vm28, %v708, 0
    %713 = vmatprep.subr.mxu0 0.0
    %714 = vmatpush1.msra.mxu0 0.0
    %715 = vmatprep.subr.mxu0 0.0
    %716 = vmatpush1.msra.mxu0 0.0
    %717 = vmatprep.subr.mxu0 0.0
    %718 = vmatpush1.msra.mxu0 0.0
    %719 = vmatprep.subr.mxu0 0.0
    %720 = vmatpush1.msra.mxu0 0.0
    %721 = vmatprep.subr.mxu0 0.0
    %722 = vmatpush1.msra.mxu0 0.0
    %723 = vmatprep.subr.mxu0 0.0
    %724 = vmatpush1.msra.mxu0 0.0
    %725 = vmatprep.subr.mxu0 0.0
    %726 = vmatpush1.msra.mxu0 0.0
    %727 = vmatprep.subr.mxu0 0.0
    %728 = vmatpush1.msra.mxu0 0.0
    %729 = vmatprep.subr.mxu0 0.0
    %730 = vmatpush1.msra.mxu0 0.0
    %731 = vmatprep.subr.mxu0 0.0
    %732 = vmatpush1.msra.mxu0 0.0
    %733 = vmatprep.subr.mxu0 0.0
    %734 = vmatpush1.msra.mxu0 0.0
    %735 = vmatprep.subr.mxu0 0.0
    %736 = vmatpush1.msra.mxu0 0.0
    %737 = vmatprep.subr.mxu0 0.0
    %738 = vmatpush1.msra.mxu0 0.0
    %739 = vmatprep.subr.mxu0 0.0
    %740 = vmatpush1.msra.mxu0 %v711
    %741 = vmatprep.subr.mxu0 0.0
    %742 = vmatpush1.msra.mxu0 %v709
    %743 = vmatprep.subr.mxu0 0.0
    %744 = vmatpush1.msra.mxu0 %v559
    %745 = vmatprep.subr.mxu0 0.0
    %746 = vmatpush2.msra.mxu0 0.0
    %747 = vmatprep.subr.mxu0 0.0
    %748 = vmatpush2.msra.mxu0 0.0
    %749 = vmatprep.subr.mxu0 0.0
    %750 = vmatpush2.msra.mxu0 0.0
    %751 = vmatprep.subr.mxu0 0.0
    %752 = vmatpush2.msra.mxu0 0.0
    %753 = vmatprep.subr.mxu0 0.0
    %754 = vmatpush2.msra.mxu0 0.0
    %755 = vmatprep.subr.mxu0 0.0
    %756 = vmatpush2.msra.mxu0 0.0
    %757 = vmatprep.subr.mxu0 0.0
    %758 = vmatpush2.msra.mxu0 0.0
    %759 = vmatprep.subr.mxu0 0.0
    %760 = vmatpush2.msra.mxu0 0.0
    %761 = vmatprep.subr.mxu0 0.0
    %762 = vmatpush2.msra.mxu0 0.0
    %763 = vmatprep.subr.mxu0 0.0
    %764 = vmatpush2.msra.mxu0 0.0
    %765 = vmatprep.subr.mxu0 0.0
    %766 = vmatpush2.msra.mxu0 0.0
    %767 = vmatprep.subr.mxu0 0.0
    %768 = vmatpush2.msra.mxu0 0.0
    %769 = vmatprep.subr.mxu0 0.0
    %770 = vmatpush2.msra.mxu0 0.0
    %771 = vmatprep.subr.mxu0 0.0
    %772 = vmatpush2.msra.mxu0 0.0
    %773 = vmatprep.subr.mxu0 0.0
    %774 = vmatpush2.msra.mxu0 0.0
    %775 = vmatprep.subr.mxu0 0.0
    %776 = vmatpush2.msra.mxu0 0.0
    %777 = vmatprep.mubr.f32.mxu0 0.0
    %778 = vmatmul.mubr.f32.gmra.mxu0 %v26
    %v779 = vpop.f32.mrf.mxu0
    %v780 = vadd.f32 0.0, %v779
    %v781 = vpop.f32.mrf.mxu0
    %782 = vdwg.mxu0
    %v783 = vmax.f32 %v707, %v780
    %v785 = vsel %vm28, %v22, 0
    %787 = vmatprep.subr.mxu0 0.0
    %788 = vmatpush1.msra.mxu0 0.0
    %789 = vmatprep.subr.mxu0 0.0
    %790 = vmatpush1.msra.mxu0 0.0
    %791 = vmatprep.subr.mxu0 0.0
    %792 = vmatpush1.msra.mxu0 0.0
    %793 = vmatprep.subr.mxu0 0.0
    %794 = vmatpush1.msra.mxu0 0.0
    %795 = vmatprep.subr.mxu0 0.0
    %796 = vmatpush1.msra.mxu0 0.0
    %797 = vmatprep.subr.mxu0 0.0
    %798 = vmatpush1.msra.mxu0 0.0
    %799 = vmatprep.subr.mxu0 0.0
    %800 = vmatpush1.msra.mxu0 0.0
    %801 = vmatprep.subr.mxu0 0.0
    %802 = vmatpush1.msra.mxu0 0.0
    %803 = vmatprep.subr.mxu0 0.0
    %804 = vmatpush1.msra.mxu0 0.0
    %805 = vmatprep.subr.mxu0 0.0
    %806 = vmatpush1.msra.mxu0 0.0
    %807 = vmatprep.subr.mxu0 0.0
    %808 = vmatpush1.msra.mxu0 0.0
    %809 = vmatprep.subr.mxu0 0.0
    %810 = vmatpush1.msra.mxu0 0.0
    %811 = vmatprep.subr.mxu0 0.0
    %812 = vmatpush1.msra.mxu0 0.0
    %813 = vmatprep.subr.mxu0 0.0
    %814 = vmatpush1.msra.mxu0 %v785
    %815 = vmatprep.subr.mxu0 0.0
    %816 = vmatpush1.msra.mxu0 %v21
    %817 = vmatprep.subr.mxu0 0.0
    %818 = vmatpush1.msra.mxu0 %v20
    %819 = vmatprep.subr.mxu0 0.0
    %820 = vmatpush2.msra.mxu0 0.0
    %821 = vmatprep.subr.mxu0 0.0
    %822 = vmatpush2.msra.mxu0 0.0
    %823 = vmatprep.subr.mxu0 0.0
    %824 = vmatpush2.msra.mxu0 0.0
    %825 = vmatprep.subr.mxu0 0.0
    %826 = vmatpush2.msra.mxu0 0.0
    %827 = vmatprep.subr.mxu0 0.0
    %828 = vmatpush2.msra.mxu0 0.0
    %829 = vmatprep.subr.mxu0 0.0
    %830 = vmatpush2.msra.mxu0 0.0
    %831 = vmatprep.subr.mxu0 0.0
    %832 = vmatpush2.msra.mxu0 0.0
    %833 = vmatprep.subr.mxu0 0.0
    %834 = vmatpush2.msra.mxu0 0.0
    %835 = vmatprep.subr.mxu0 0.0
    %836 = vmatpush2.msra.mxu0 0.0
    %837 = vmatprep.subr.mxu0 0.0
    %838 = vmatpush2.msra.mxu0 0.0
    %839 = vmatprep.subr.mxu0 0.0
    %840 = vmatpush2.msra.mxu0 0.0
    %841 = vmatprep.subr.mxu0 0.0
    %842 = vmatpush2.msra.mxu0 0.0
    %843 = vmatprep.subr.mxu0 0.0
    %844 = vmatpush2.msra.mxu0 0.0
    %845 = vmatprep.subr.mxu0 0.0
    %846 = vmatpush2.msra.mxu0 0.0
    %847 = vmatprep.subr.mxu0 0.0
    %848 = vmatpush2.msra.mxu0 0.0
    %849 = vmatprep.subr.mxu0 0.0
    %850 = vmatpush2.msra.mxu0 0.0
    %851 = vmatprep.mubr.f32.mxu0 0.0
    %852 = vmatmul.mubr.f32.gmra.mxu0 %v26
    %v853 = vpop.f32.mrf.mxu0
    %v854 = vadd.f32 0.0, %v853
    %v855 = vpop.f32.mrf.mxu0
    %856 = vdwg.mxu0
    %v857 = vmax.f32 %v783, %v854
    %v858 = vrot.slane %v22, 4
    %v859 = vsel %vm28, %v708, %v858
    %v861 = vsel %vm28, %v858, 0
    %863 = vmatprep.subr.mxu0 0.0
    %864 = vmatpush1.msra.mxu0 0.0
    %865 = vmatprep.subr.mxu0 0.0
    %866 = vmatpush1.msra.mxu0 0.0
    %867 = vmatprep.subr.mxu0 0.0
    %868 = vmatpush1.msra.mxu0 0.0
    %869 = vmatprep.subr.mxu0 0.0
    %870 = vmatpush1.msra.mxu0 0.0
    %871 = vmatprep.subr.mxu0 0.0
    %872 = vmatpush1.msra.mxu0 0.0
    %873 = vmatprep.subr.mxu0 0.0
    %874 = vmatpush1.msra.mxu0 0.0
    %875 = vmatprep.subr.mxu0 0.0
    %876 = vmatpush1.msra.mxu0 0.0
    %877 = vmatprep.subr.mxu0 0.0
    %878 = vmatpush1.msra.mxu0 0.0
    %879 = vmatprep.subr.mxu0 0.0
    %880 = vmatpush1.msra.mxu0 0.0
    %881 = vmatprep.subr.mxu0 0.0
    %882 = vmatpush1.msra.mxu0 0.0
    %883 = vmatprep.subr.mxu0 0.0
    %884 = vmatpush1.msra.mxu0 0.0
    %885 = vmatprep.subr.mxu0 0.0
    %886 = vmatpush1.msra.mxu0 0.0
    %887 = vmatprep.subr.mxu0 0.0
    %888 = vmatpush1.msra.mxu0 0.0
    %889 = vmatprep.subr.mxu0 0.0
    %890 = vmatpush1.msra.mxu0 %v861
    %891 = vmatprep.subr.mxu0 0.0
    %892 = vmatpush1.msra.mxu0 %v859
    %893 = vmatprep.subr.mxu0 0.0
    %894 = vmatpush1.msra.mxu0 %v709
    %895 = vmatprep.subr.mxu0 0.0
    %896 = vmatpush2.msra.mxu0 0.0
    %897 = vmatprep.subr.mxu0 0.0
    %898 = vmatpush2.msra.mxu0 0.0
    %899 = vmatprep.subr.mxu0 0.0
    %900 = vmatpush2.msra.mxu0 0.0
    %901 = vmatprep.subr.mxu0 0.0
    %902 = vmatpush2.msra.mxu0 0.0
    %903 = vmatprep.subr.mxu0 0.0
    %904 = vmatpush2.msra.mxu0 0.0
    %905 = vmatprep.subr.mxu0 0.0
    %906 = vmatpush2.msra.mxu0 0.0
    %907 = vmatprep.subr.mxu0 0.0
    %908 = vmatpush2.msra.mxu0 0.0
    %909 = vmatprep.subr.mxu0 0.0
    %910 = vmatpush2.msra.mxu0 0.0
    %911 = vmatprep.subr.mxu0 0.0
    %912 = vmatpush2.msra.mxu0 0.0
    %913 = vmatprep.subr.mxu0 0.0
    %914 = vmatpush2.msra.mxu0 0.0
    %915 = vmatprep.subr.mxu0 0.0
    %916 = vmatpush2.msra.mxu0 0.0
    %917 = vmatprep.subr.mxu0 0.0
    %918 = vmatpush2.msra.mxu0 0.0
    %919 = vmatprep.subr.mxu0 0.0
    %920 = vmatpush2.msra.mxu0 0.0
    %921 = vmatprep.subr.mxu0 0.0
    %922 = vmatpush2.msra.mxu0 0.0
    %923 = vmatprep.subr.mxu0 0.0
    %924 = vmatpush2.msra.mxu0 0.0
    %925 = vmatprep.subr.mxu0 0.0
    %926 = vmatpush2.msra.mxu0 0.0
    %927 = vmatprep.mubr.f32.mxu0 0.0
    %928 = vmatmul.mubr.f32.gmra.mxu0 %v26
    %v929 = vpop.f32.mrf.mxu0
    %v930 = vadd.f32 0.0, %v929
    %v931 = vpop.f32.mrf.mxu0
    %932 = vdwg.mxu0
    %v933 = vmax.f32 %v857, %v930
    %v934 = vld [vmem:[%s2] sm:$0xff]
    %936 = vset.pattern.permute.xlu0 0
    %937 = vperm.xlu0 %936, %v934
    %v938 = vpop.permute.xlu0 %937
    %v940 = vadd.f32 %v933, %v938
    %vm941 = vcmask 130048
    %942 = vst.msk [vmem:[#allocation2] sm:$0xff] %vm941, %v940
    // Predicated region
    $region14: #{tpu_custom_call.1} parent=1 // pred_check
      _
    $region15: #{tpu_custom_call.1} parent=1 // pred_check_branch
      %944 = sbr.rel (0) target = $region17
    $region16: #{tpu_custom_call.1} parent=1 // pred_region
      %s946 = ssub.s32 128, 128
      %947 = vsyncadd [#allocation3], %s946
      %s949 = sshll.u32 [#allocation2], 4
      %s950 = int_to_ptr.vmem [resolvable:$true] %s949
      %952 = dma.vmem_to_hbm [thread:$0]  %s950, 128, %s3, [#allocation3]
    $region17: #{tpu_custom_call.1} parent=1 // pred_fallthru
      _
    // Predicated region
    $region18: #{tpu_custom_call.1} parent=1 // pred_check
      _
    $region19: #{tpu_custom_call.1} parent=1 // pred_check_branch
      %954 = sbr.rel (0) target = $region21
    $region20: #{tpu_custom_call.1} parent=1 // pred_region
      %955 = dma.done [#allocation3], 128
    $region21: #{tpu_custom_call.1} parent=1 // pred_fallthru
      _
    %956 = vsyncpa [#allocation3], 1

</llo_original>
